<compile_context>
chip_gen: v7x
topology: tpu7x:2x2x1
jax: 0.10.0
libtpu: 0.0.40
codegen_flags: <defaults>
</compile_context>

<pallas_src>
import functools

import jax
import jax.numpy as jnp
from jax.experimental import pallas as pl
from jax.experimental.pallas import tpu as pltpu


def _cdiv(a, b):
    return -(-a // b)


def _round_up(x, m):
    return _cdiv(x, m) * m


def _block_diag(w, n):
    """Block-diagonal matrix with `n` copies of `w` on the diagonal."""
    if n == 1:
        return w
    fi, fo = w.shape
    eye = jnp.eye(n, dtype=w.dtype)
    # result[p*fi + i, q*fo + j] = eye[p, q] * w[i, j]
    return (eye[:, None, :, None] * w[None, :, None, :]).reshape(n * fi, n * fo)


def prepare_params(params, *, pack=8, use_bf16=True):
    """One-time packing of the MLP weights (hoisted out of the per-call path).

    pack=8 is the v6e/v7x default (K,N <= 256 per layer); use pack=4 on v5e.
    """
    w1, b1, w2, b2, w3, b3 = params
    pack = max(1, int(pack))
    compute_dtype = jnp.bfloat16 if use_bf16 else jnp.float32
    # Block-diagonal weights process `pack` independent rows in one matmul;
    # zero off-diagonal blocks contribute exactly 0 to the f32 accumulation.
    w1p = _block_diag(w1, pack).astype(compute_dtype)
    w2p = _block_diag(w2, pack).astype(compute_dtype)
    w3p = _block_diag(w3, pack).astype(compute_dtype)
    b1p = jnp.tile(b1.astype(jnp.float32), (1, pack))
    b2p = jnp.tile(b2.astype(jnp.float32), (1, pack))
    b3p = jnp.tile(b3.astype(jnp.float32), (1, pack))
    return (w1p, b1p, w2p, b2p, w3p, b3p)


def _designer_kernel(obs_ref, w1_ref, b1_ref, w2_ref, b2_ref, w3_ref, b3_ref,
                     out_ref, *, output_multiplier):
    # Layer 1: MXU matmul, f32 accumulation; bias + ReLU in f32, with the bf16
    # down-cast fused into the activation (halves inter-layer bytes/vregs).
    h1 = jnp.dot(obs_ref[...], w1_ref[...], preferred_element_type=jnp.float32)
    h1 = jnp.maximum(h1 + b1_ref[...], 0.0).astype(w2_ref.dtype)

    # Layer 2: Linear + ReLU (same fused down-cast).
    h2 = jnp.dot(h1, w2_ref[...], preferred_element_type=jnp.float32)
    h2 = jnp.maximum(h2 + b2_ref[...], 0.0).astype(w3_ref.dtype)

    # Layer 3: Linear.
    logits = jnp.dot(h2, w3_ref[...], preferred_element_type=jnp.float32)
    logits = logits + b3_ref[...]

    # output_multiplier * sigmoid(logits); lane-dense packed store.
    out_ref[...] = (output_multiplier * jax.nn.sigmoid(logits)).astype(out_ref.dtype)


def _choose_grid(B, pack, rows_per_block, prefer_even_steps, max_tm):
    """Pick (tm, rows_block, steps): big tiles, even step count, v7x VMEM cap."""
    granularity = pack * 8                        # tm must be a multiple of 8
    steps = max(1, _cdiv(B, rows_per_block))
    if prefer_even_steps and B >= 2 * granularity:
        steps = max(2, steps)                     # give both v7x TCs a tile
    if steps > 1 and steps % 2:
        steps += 1                                # balanced across 2 TCs
    rows_block = _round_up(_cdiv(B, steps), granularity)
    tm = rows_block // pack
    if tm > max_tm:                               # keep per-step VMEM a few MiB
        tm = max_tm
        rows_block = tm * pack
        steps = _cdiv(B, rows_block)
        if steps > 1 and steps % 2:
            steps += 1
    return tm, rows_block, steps


@functools.partial(
    jax.jit,
    static_argnames=("output_multiplier", "rows_per_block", "prefer_even_steps",
                     "max_tm", "out_dtype"))
def designer_net_forward(obs, packed_params, *, output_multiplier,
                         rows_per_block=16384, prefer_even_steps=True,
                         max_tm=2048, out_dtype=jnp.float32):
    """Full DesignerNet MLP as one batch-tiled Pallas kernel (jitted wrapper)."""
    w1p, b1p, w2p, b2p, w3p, b3p = packed_params
    B, obs_len = obs.shape
    pack = w1p.shape[0] // obs_len
    num_brackets = w3p.shape[1] // pack

    tm, rows_block, steps = _choose_grid(B, pack, rows_per_block,
                                         prefer_even_steps, max_tm)
    B_pad = rows_block * steps

    # Pad the batch, then fuse `pack` consecutive rows per packed row.  The
    # reshape of the contiguous (B_pad, obs_len) array is zero-copy; the
    # pad/reshape/cast fuse with the pallas_call under jit.
    if B_pad != B:
        obs = jnp.pad(obs, ((0, B_pad - B), (0, 0)))
    obs_packed = obs.reshape(B_pad // pack, pack * obs_len).astype(w1p.dtype)

    kernel = functools.partial(_designer_kernel,
                               output_multiplier=float(output_multiplier))

    # Weights/biases: same block every grid step -> loaded once, resident in VMEM.
    resident = lambda a: pl.BlockSpec(a.shape, lambda i: (0, 0))

    out_packed = pl.pallas_call(
        kernel,
        out_shape=jax.ShapeDtypeStruct((B_pad // pack, pack * num_brackets),
                                       out_dtype),
        grid=(steps,),
        in_specs=[
            pl.BlockSpec((tm, pack * obs_len), lambda i: (i, 0)),  # streamed obs
            resident(w1p), resident(b1p),
            resident(w2p), resident(b2p),
            resident(w3p), resident(b3p),
        ],
        out_specs=pl.BlockSpec((tm, pack * num_brackets), lambda i: (i, 0)),
        compiler_params=pltpu.CompilerParams(
            dimension_semantics=("parallel",)),  # shard batch grid across v7x TCs
    )(obs_packed, w1p, b1p, w2p, b2p, w3p, b3p)

    # Zero-copy unpack back to (B_pad, num_brackets); drop the batch padding.
    return out_packed.reshape(B_pad, num_brackets)[:B]


def init_params(key, principal_obs_length, h_dim, num_brackets):
    """Deterministic parameter init (Kaiming-uniform-ish, like nn.Linear default)."""
    ks = jax.random.split(key, 6)

    def linear(kw, kb, fan_in, fan_out):
        bound = 1.0 / jnp.sqrt(fan_in)
        w = jax.random.uniform(kw, (fan_in, fan_out), jnp.float32, -bound, bound)
        b = jax.random.uniform(kb, (1, fan_out), jnp.float32, -bound, bound)
        return w, b

    w1, b1 = linear(ks[0], ks[1], principal_obs_length, h_dim)
    w2, b2 = linear(ks[2], ks[3], h_dim, h_dim)
    w3, b3 = linear(ks[4], ks[5], h_dim, num_brackets)
    return (w1, b1, w2, b2, w3, b3)


def reference_forward(obs, params, output_multiplier, use_bf16=True):
    """Pure-JAX reference (mirrors the kernel's bf16-input / f32-accumulate math)."""
    w1, b1, w2, b2, w3, b3 = params
    cdt = jnp.bfloat16 if use_bf16 else jnp.float32
    h1 = jnp.maximum(
        jnp.dot(obs.astype(cdt), w1.astype(cdt),
                preferred_element_type=jnp.float32) + b1, 0.0)
    h2 = jnp.maximum(
        jnp.dot(h1.astype(cdt), w2.astype(cdt),
                preferred_element_type=jnp.float32) + b2, 0.0)
    logits = jnp.dot(h2.astype(cdt), w3.astype(cdt),
                     preferred_element_type=jnp.float32) + b3
    return output_multiplier * jax.nn.sigmoid(logits)


if __name__ == "__main__":
    # Shapes consistent with the module's forward.
    principal_obs_length = 16
    h_dim = 32
    num_brackets = 8
    output_multiplier = 2.0

    key = jax.random.PRNGKey(0)
    k_obs, k_obs_big, k_params = jax.random.split(key, 3)
    params = init_params(k_params, principal_obs_length, h_dim, num_brackets)

    # One-time weight packing, hoisted out of the per-call path.
    packed = prepare_params(params, pack=8, use_bf16=True)      # v6e/v7x default
    packed_v5e = prepare_params(params, pack=4, use_bf16=True)  # v5e-tuned variant

    # Small case (batch of 2 principal observations) — single-block path.
    obs_small = jax.random.normal(k_obs, (2, principal_obs_length), dtype=jnp.float32)
    out_small = jax.block_until_ready(
        designer_net_forward(obs_small, packed,
                             output_multiplier=output_multiplier))
    ref_small = reference_forward(obs_small, params, output_multiplier)
    assert out_small.shape == (2, num_brackets)
    assert jnp.allclose(out_small, ref_small, atol=1e-3, rtol=1e-3), \
        "small-batch mismatch vs reference"

    # v5e-tuned pack=4 variant must be semantically identical.
    out_small_p4 = jax.block_until_ready(
        designer_net_forward(obs_small, packed_v5e,
                             output_multiplier=output_multiplier))
    assert jnp.allclose(out_small_p4, ref_small, atol=1e-3, rtol=1e-3), \
        "pack=4 variant mismatch vs reference"

    # Larger batch exercising padding + the even (2-step) pipelined batch grid.
    obs_big = jax.random.normal(k_obs_big, (3000, principal_obs_length),
                                dtype=jnp.float32)
    out_big = jax.block_until_ready(
        designer_net_forward(obs_big, packed,
                             output_multiplier=output_multiplier))
    ref_big = reference_forward(obs_big, params, output_multiplier)
    assert out_big.shape == (3000, num_brackets)
    assert jnp.allclose(out_big, ref_big, atol=1e-3, rtol=1e-3), \
        "large-batch mismatch vs reference"

    print("KERNEL_OK")
</pallas_src>

<mosaic_0001>
module attributes {stable_mosaic.version = 11 : i64} {
  func.func @_designer_kernel(%arg0: i32, %arg1: memref<8x128xbf16, #tpu.memory_space<vmem>>, %arg2: memref<128x256xbf16, #tpu.memory_space<vmem>>, %arg3: memref<1x256xf32, #tpu.memory_space<vmem>>, %arg4: memref<256x256xbf16, #tpu.memory_space<vmem>>, %arg5: memref<1x256xf32, #tpu.memory_space<vmem>>, %arg6: memref<256x64xbf16, #tpu.memory_space<vmem>>, %arg7: memref<1x64xf32, #tpu.memory_space<vmem>>, %arg8: memref<8x64xf32, #tpu.memory_space<vmem>>) attributes {dimension_semantics = [#tpu.dimension_semantics<parallel>], iteration_bounds = array<i64: 1>, scalar_prefetch = 0 : i64, scratch_operands = 0 : i64, tpu.core_type = #tpu.core_type<tc>, window_params = [{transform_indices = @transform_0, window_bounds = array<i64: 8, 128>}, {pipeline_mode = #tpu.pipeline_mode<synchronous>, transform_indices = @transform_1, window_bounds = array<i64: 128, 256>}, {pipeline_mode = #tpu.pipeline_mode<synchronous>, transform_indices = @transform_2, window_bounds = array<i64: 1, 256>}, {pipeline_mode = #tpu.pipeline_mode<synchronous>, transform_indices = @transform_3, window_bounds = array<i64: 256, 256>}, {pipeline_mode = #tpu.pipeline_mode<synchronous>, transform_indices = @transform_4, window_bounds = array<i64: 1, 256>}, {pipeline_mode = #tpu.pipeline_mode<synchronous>, transform_indices = @transform_5, window_bounds = array<i64: 256, 64>}, {pipeline_mode = #tpu.pipeline_mode<synchronous>, transform_indices = @transform_6, window_bounds = array<i64: 1, 64>}, {transform_indices = @transform_7, window_bounds = array<i64: 8, 64>}]} {
    %c0 = arith.constant 0 : index
    %c0_0 = arith.constant 0 : index
    %0 = vector.load %arg1[%c0, %c0_0] : memref<8x128xbf16, #tpu.memory_space<vmem>>, vector<8x128xbf16>
    %c0_1 = arith.constant 0 : index
    %c0_2 = arith.constant 0 : index
    %1 = vector.load %arg2[%c0_1, %c0_2] : memref<128x256xbf16, #tpu.memory_space<vmem>>, vector<128x256xbf16>
    %cst = arith.constant dense<0.000000e+00> : vector<8x256xf32>
    %2 = tpu.matmul %0, %1, %cst {dimension_numbers = #tpu.dot_dimension_numbers<[1], [0], [0], [1], [0, 0, 1, 1], [], []>} : vector<8x128xbf16>, vector<128x256xbf16>, vector<8x256xf32> -> vector<8x256xf32>
    %c0_3 = arith.constant 0 : index
    %c0_4 = arith.constant 0 : index
    %3 = vector.load %arg3[%c0_3, %c0_4] : memref<1x256xf32, #tpu.memory_space<vmem>>, vector<1x256xf32>
    %4 = vector.broadcast %3 : vector<1x256xf32> to vector<8x256xf32>
    %5 = arith.addf %2, %4 : vector<8x256xf32>
    %cst_5 = arith.constant 0.000000e+00 : f32
    %6 = vector.broadcast %cst_5 : f32 to vector<8x256xf32>
    %7 = arith.maximumf %5, %6 : vector<8x256xf32>
    %8 = arith.truncf %7 : vector<8x256xf32> to vector<8x256xbf16>
    %c0_6 = arith.constant 0 : index
    %c0_7 = arith.constant 0 : index
    %9 = vector.load %arg4[%c0_6, %c0_7] : memref<256x256xbf16, #tpu.memory_space<vmem>>, vector<256x256xbf16>
    %cst_8 = arith.constant dense<0.000000e+00> : vector<8x256xf32>
    %10 = tpu.matmul %8, %9, %cst_8 {dimension_numbers = #tpu.dot_dimension_numbers<[1], [0], [0], [1], [0, 0, 1, 1], [], []>} : vector<8x256xbf16>, vector<256x256xbf16>, vector<8x256xf32> -> vector<8x256xf32>
    %c0_9 = arith.constant 0 : index
    %c0_10 = arith.constant 0 : index
    %11 = vector.load %arg5[%c0_9, %c0_10] : memref<1x256xf32, #tpu.memory_space<vmem>>, vector<1x256xf32>
    %12 = vector.broadcast %11 : vector<1x256xf32> to vector<8x256xf32>
    %13 = arith.addf %10, %12 : vector<8x256xf32>
    %cst_11 = arith.constant 0.000000e+00 : f32
    %14 = vector.broadcast %cst_11 : f32 to vector<8x256xf32>
    %15 = arith.maximumf %13, %14 : vector<8x256xf32>
    %16 = arith.truncf %15 : vector<8x256xf32> to vector<8x256xbf16>
    %c0_12 = arith.constant 0 : index
    %c0_13 = arith.constant 0 : index
    %17 = vector.load %arg6[%c0_12, %c0_13] : memref<256x64xbf16, #tpu.memory_space<vmem>>, vector<256x64xbf16>
    %cst_14 = arith.constant dense<0.000000e+00> : vector<8x64xf32>
    %18 = tpu.matmul %16, %17, %cst_14 {dimension_numbers = #tpu.dot_dimension_numbers<[1], [0], [0], [1], [0, 0, 1, 1], [], []>} : vector<8x256xbf16>, vector<256x64xbf16>, vector<8x64xf32> -> vector<8x64xf32>
    %c0_15 = arith.constant 0 : index
    %c0_16 = arith.constant 0 : index
    %19 = vector.load %arg7[%c0_15, %c0_16] : memref<1x64xf32, #tpu.memory_space<vmem>>, vector<1x64xf32>
    %20 = vector.broadcast %19 : vector<1x64xf32> to vector<8x64xf32>
    %21 = arith.addf %18, %20 : vector<8x64xf32>
    %22 = arith.negf %21 : vector<8x64xf32>
    %23 = math.exp %22 : vector<8x64xf32>
    %cst_17 = arith.constant 1.000000e+00 : f32
    %24 = vector.broadcast %cst_17 : f32 to vector<8x64xf32>
    %25 = arith.addf %24, %23 : vector<8x64xf32>
    %26 = arith.divf %24, %25 : vector<8x64xf32>
    %cst_18 = arith.constant 2.000000e+00 : f32
    %27 = vector.broadcast %cst_18 : f32 to vector<8x64xf32>
    %28 = arith.mulf %27, %26 : vector<8x64xf32>
    %c0_19 = arith.constant 0 : index
    %c0_20 = arith.constant 0 : index
    %29 = vector.load %arg8[%c0_19, %c0_20] : memref<8x64xf32, #tpu.memory_space<vmem>>, vector<8x64xf32>
    tpu.vector_store %arg8[%c0_19, %c0_20], %28 {strides = array<i32>} : memref<8x64xf32, #tpu.memory_space<vmem>>, vector<8x64xf32>,
    return
  }
  func.func @transform_0(%arg0: i32) -> (i32, i32) {
    %c0_i32 = arith.constant 0 : i32
    %c0_i32_0 = arith.constant 0 : i32
    return %arg0, %c0_i32 : i32, i32
  }
  func.func @transform_1(%arg0: i32) -> (i32, i32) {
    %c0_i32 = arith.constant 0 : i32
    %c0_i32_0 = arith.constant 0 : i32
    %c0_i32_1 = arith.constant 0 : i32
    return %c0_i32, %c0_i32_0 : i32, i32
  }
  func.func @transform_2(%arg0: i32) -> (i32, i32) {
    %c0_i32 = arith.constant 0 : i32
    %c0_i32_0 = arith.constant 0 : i32
    %c0_i32_1 = arith.constant 0 : i32
    return %c0_i32, %c0_i32_0 : i32, i32
  }
  func.func @transform_3(%arg0: i32) -> (i32, i32) {
    %c0_i32 = arith.constant 0 : i32
    %c0_i32_0 = arith.constant 0 : i32
    %c0_i32_1 = arith.constant 0 : i32
    return %c0_i32, %c0_i32_0 : i32, i32
  }
  func.func @transform_4(%arg0: i32) -> (i32, i32) {
    %c0_i32 = arith.constant 0 : i32
    %c0_i32_0 = arith.constant 0 : i32
    %c0_i32_1 = arith.constant 0 : i32
    return %c0_i32, %c0_i32_0 : i32, i32
  }
  func.func @transform_5(%arg0: i32) -> (i32, i32) {
    %c0_i32 = arith.constant 0 : i32
    %c0_i32_0 = arith.constant 0 : i32
    %c0_i32_1 = arith.constant 0 : i32
    return %c0_i32, %c0_i32_0 : i32, i32
  }
  func.func @transform_6(%arg0: i32) -> (i32, i32) {
    %c0_i32 = arith.constant 0 : i32
    %c0_i32_0 = arith.constant 0 : i32
    %c0_i32_1 = arith.constant 0 : i32
    return %c0_i32, %c0_i32_0 : i32, i32
  }
  func.func @transform_7(%arg0: i32) -> (i32, i32) {
    %c0_i32 = arith.constant 0 : i32
    %c0_i32_0 = arith.constant 0 : i32
    return %arg0, %c0_i32 : i32, i32
  }
}

</mosaic_0001>

<llo_original>
// kernel: designer_net_forward.1
$region0: #{designer_net_forward.1}
  #allocation0 [shape = 'u32[]', space=smem, size = 0x4, offset = 0x4, fixed_abs, tag = 'smem constant byte address 0x4 - core index']
  #allocation1 [shape = 'u32[144,128]{1,0:T(1,128)}', space=vmem, size = 0x12000, scoped, tag = 'internal scratch']
  %s0 = inlined_call_operand.vmem [shape: bf16[8,128], index: 0, kind: input, shape index: {}]
  %s1 = inlined_call_operand.hbm [shape: bf16[128,256], index: 1, kind: input, shape index: {}]
  %s2 = inlined_call_operand.vmem [shape: f32[1,256], index: 2, kind: input, shape index: {}]
  %s3 = inlined_call_operand.vmem [shape: bf16[256,256], index: 3, kind: input, shape index: {}]
  %s4 = inlined_call_operand.vmem [shape: f32[1,256], index: 4, kind: input, shape index: {}]
  %s5 = inlined_call_operand.vmem [shape: bf16[256,64], index: 5, kind: input, shape index: {}]
  %s6 = inlined_call_operand.vmem [shape: f32[1,64], index: 6, kind: input, shape index: {}]
  %s7 = inlined_call_operand.vmem [shape: f32[8,64], index: 7, kind: output, shape index: {}]
  %s8 = sld [smem:[#allocation0]]
  $region42: #{designer_net_forward.1} parent=0
    _
  %s10 = ssub.s32 1, %s8
  %s11 = scalar_select 0, %s10, %s8
  $region1: #{designer_net_forward.1} parent=0
    #allocation2 [shape = 'u8[65536]{0}', space=vmem, size = 0x10000, scoped, tag = 'input window, operand 1, single buffered']
    #allocation3 [shape = 's32[1]{0}', space=sflag, size = 0x4, scoped, tag = 'scoped memory for designer_net_forward.1']
    %12 = vsyncpa [#allocation3], 0
    // Predicated region
    $region2: #{designer_net_forward.1} parent=1 // pred_check
      _
    $region3: #{designer_net_forward.1} parent=1 // pred_check_branch
      %14 = sbr.rel (0) target = $region5
    $region4: #{designer_net_forward.1} parent=1 // pred_region
      _
    $region5: #{designer_net_forward.1} parent=1 // pred_fallthru
      _
    // Predicated region
    $region6: #{designer_net_forward.1} parent=1 // pred_check
      _
    $region7: #{designer_net_forward.1} parent=1 // pred_check_branch
      %16 = sbr.rel (0) target = $region9
    $region8: #{designer_net_forward.1} parent=1 // pred_region
      %s18 = ssub.s32 2048, 2048
      %19 = vsyncadd [#allocation3], %s18
      %s20 = sshll.u32 [#allocation2], 4
      %s21 = int_to_ptr.vmem [resolvable:$true] %s20
      %26 = dma.hbm_to_vmem [thread:$0]  %s1, 2048, %s21, [#allocation3], 128, 128, 8
    $region9: #{designer_net_forward.1} parent=1 // pred_fallthru
      _
    // Predicated region
    $region10: #{designer_net_forward.1} parent=1 // pred_check
      _
    $region11: #{designer_net_forward.1} parent=1 // pred_check_branch
      %28 = sbr.rel (0) target = $region13
    $region12: #{designer_net_forward.1} parent=1 // pred_region
      _
    $region13: #{designer_net_forward.1} parent=1 // pred_fallthru
      _
    // Predicated region
    $region14: #{designer_net_forward.1} parent=1 // pred_check
      _
    $region15: #{designer_net_forward.1} parent=1 // pred_check_branch
      %30 = sbr.rel (0) target = $region17
    $region16: #{designer_net_forward.1} parent=1 // pred_region
      _
    $region17: #{designer_net_forward.1} parent=1 // pred_fallthru
      _
    // Predicated region
    $region18: #{designer_net_forward.1} parent=1 // pred_check
      _
    $region19: #{designer_net_forward.1} parent=1 // pred_check_branch
      %32 = sbr.rel (0) target = $region21
    $region20: #{designer_net_forward.1} parent=1 // pred_region
      _
    $region21: #{designer_net_forward.1} parent=1 // pred_fallthru
      _
    // Predicated region
    $region22: #{designer_net_forward.1} parent=1 // pred_check
      _
    $region23: #{designer_net_forward.1} parent=1 // pred_check_branch
      %34 = sbr.rel (0) target = $region25
    $region24: #{designer_net_forward.1} parent=1 // pred_region
      _
    $region25: #{designer_net_forward.1} parent=1 // pred_fallthru
      _
    // Predicated region
    $region26: #{designer_net_forward.1} parent=1 // pred_check
      _
    $region27: #{designer_net_forward.1} parent=1 // pred_check_branch
      %36 = sbr.rel (0) target = $region29
    $region28: #{designer_net_forward.1} parent=1 // pred_region
      _
    $region29: #{designer_net_forward.1} parent=1 // pred_fallthru
      _
    // Predicated region
    $region30: #{designer_net_forward.1} parent=1 // pred_check
      _
    $region31: #{designer_net_forward.1} parent=1 // pred_check_branch
      %38 = sbr.rel (0) target = $region33
    $region32: #{designer_net_forward.1} parent=1 // pred_region
      %39 = dma.done [#allocation3], 2048
    $region33: #{designer_net_forward.1} parent=1 // pred_fallthru
      _
    %v41 = vld [vmem:[%s0] sm:$0xf]
    %v42 = vld [vmem:[#allocation2] sm:$0xff]
    %v43 = vld [vmem:[#allocation2 + $0x8] sm:$0xff]
    %v44 = vld [vmem:[#allocation2 + $0x10] sm:$0xff]
    %v45 = vld [vmem:[#allocation2 + $0x18] sm:$0xff]
    %v46 = vld [vmem:[#allocation2 + $0x20] sm:$0xff]
    %v47 = vld [vmem:[#allocation2 + $0x28] sm:$0xff]
    %v48 = vld [vmem:[#allocation2 + $0x30] sm:$0xff]
    %v49 = vld [vmem:[#allocation2 + $0x38] sm:$0xff]
    %v50 = vld [vmem:[#allocation2 + $0x40] sm:$0xff]
    %v51 = vld [vmem:[#allocation2 + $0x48] sm:$0xff]
    %v52 = vld [vmem:[#allocation2 + $0x50] sm:$0xff]
    %v53 = vld [vmem:[#allocation2 + $0x58] sm:$0xff]
    %v54 = vld [vmem:[#allocation2 + $0x60] sm:$0xff]
    %v55 = vld [vmem:[#allocation2 + $0x68] sm:$0xff]
    %v56 = vld [vmem:[#allocation2 + $0x70] sm:$0xff]
    %v57 = vld [vmem:[#allocation2 + $0x78] sm:$0xff]
    %v58 = vld [vmem:[%s2] sm:$0x3]
    %v60 = vlaneseq
    %v61 = vshrl.u32 %v60, 7
    %v62 = vsub.s32 0, %v61
    %v63 = vrot.slane %v58, %v62
    %v64 = vlaneseq
    %v65 = vshrl.u32 %v64, 7
    %v66 = vsub.s32 1, %v65
    %v67 = vrot.slane %v58, %v66
    %v86 = vunpack.c.l.b16 %v42
    %v87 = vunpack.c.h.b16 %v42
    %v88 = vunpack.c.l.b16 %v43
    %v89 = vunpack.c.h.b16 %v43
    %v90 = vunpack.c.l.b16 %v44
    %v91 = vunpack.c.h.b16 %v44
    %v92 = vunpack.c.l.b16 %v45
    %v93 = vunpack.c.h.b16 %v45
    %v94 = vunpack.c.l.b16 %v46
    %v95 = vunpack.c.h.b16 %v46
    %v96 = vunpack.c.l.b16 %v47
    %v97 = vunpack.c.h.b16 %v47
    %v98 = vunpack.c.l.b16 %v48
    %v99 = vunpack.c.h.b16 %v48
    %v100 = vunpack.c.l.b16 %v49
    %v101 = vunpack.c.h.b16 %v49
    %v102 = vunpack.c.l.b16 %v50
    %v103 = vunpack.c.h.b16 %v50
    %v104 = vunpack.c.l.b16 %v51
    %v105 = vunpack.c.h.b16 %v51
    %v106 = vunpack.c.l.b16 %v52
    %v107 = vunpack.c.h.b16 %v52
    %v108 = vunpack.c.l.b16 %v53
    %v109 = vunpack.c.h.b16 %v53
    %v110 = vunpack.c.l.b16 %v54
    %v111 = vunpack.c.h.b16 %v54
    %v112 = vunpack.c.l.b16 %v55
    %v113 = vunpack.c.h.b16 %v55
    %v114 = vunpack.c.l.b16 %v56
    %v115 = vunpack.c.h.b16 %v56
    %v116 = vunpack.c.l.b16 %v57
    %v117 = vunpack.c.h.b16 %v57
    %v118 = vpack.c.b16 %v88, %v86
    %v119 = vpack.c.b16 %v89, %v87
    %v120 = vpack.c.b16 %v92, %v90
    %v121 = vpack.c.b16 %v93, %v91
    %v122 = vpack.c.b16 %v96, %v94
    %v123 = vpack.c.b16 %v97, %v95
    %v124 = vpack.c.b16 %v100, %v98
    %v125 = vpack.c.b16 %v101, %v99
    %v126 = vpack.c.b16 %v104, %v102
    %v127 = vpack.c.b16 %v105, %v103
    %v128 = vpack.c.b16 %v108, %v106
    %v129 = vpack.c.b16 %v109, %v107
    %v130 = vpack.c.b16 %v112, %v110
    %v131 = vpack.c.b16 %v113, %v111
    %v132 = vpack.c.b16 %v116, %v114
    %v133 = vpack.c.b16 %v117, %v115
    %150 = vmatprep.subr.bf16.mxu0 %v119
    %151 = vmatpush1.bf16.msra.mxu0 %v118
    %152 = vmatprep.subr.bf16.mxu0 %v121
    %153 = vmatpush1.bf16.msra.mxu0 %v120
    %154 = vmatprep.subr.bf16.mxu0 %v123
    %155 = vmatpush1.bf16.msra.mxu0 %v122
    %156 = vmatprep.subr.bf16.mxu0 %v125
    %157 = vmatpush1.bf16.msra.mxu0 %v124
    %158 = vmatprep.subr.bf16.mxu0 %v127
    %159 = vmatpush1.bf16.msra.mxu0 %v126
    %160 = vmatprep.subr.bf16.mxu0 %v129
    %161 = vmatpush1.bf16.msra.mxu0 %v128
    %162 = vmatprep.subr.bf16.mxu0 %v131
    %163 = vmatpush1.bf16.msra.mxu0 %v130
    %164 = vmatprep.subr.bf16.mxu0 %v133
    %165 = vmatpush1.bf16.msra.mxu0 %v132
    %166 = vmatprep.subr.bf16.mxu0 0
    %167 = vmatpush1.bf16.msra.mxu0 0
    %168 = vmatprep.subr.bf16.mxu0 0
    %169 = vmatpush1.bf16.msra.mxu0 0
    %170 = vmatprep.subr.bf16.mxu0 0
    %171 = vmatpush1.bf16.msra.mxu0 0
    %172 = vmatprep.subr.bf16.mxu0 0
    %173 = vmatpush1.bf16.msra.mxu0 0
    %174 = vmatprep.subr.bf16.mxu0 0
    %175 = vmatpush1.bf16.msra.mxu0 0
    %176 = vmatprep.subr.bf16.mxu0 0
    %177 = vmatpush1.bf16.msra.mxu0 0
    %178 = vmatprep.subr.bf16.mxu0 0
    %179 = vmatpush1.bf16.msra.mxu0 0
    %180 = vmatprep.subr.bf16.mxu0 0
    %181 = vmatpush1.bf16.msra.mxu0 0
    %182 = vmatprep.mubr.bf16.mxu0 0
    %183 = vmatmul.mubr.bf16.gmra.mrb[0].mxu0 %v41
    %v184 = vpop.f32.mrb[0].mxu0
    %v185 = vadd.f32 %v63, %v184
    %v186 = vpop.f32.mrb[0].mxu0
    %v187 = vadd.f32 %v67, %v186
    %v188 = vpop.f32.mrb[0].mxu0
    %v189 = vpop.f32.mrb[0].mxu0
    %190 = vdwg.mxu0
    %v191 = vmax.f32 %v185, 0.0
    %v192 = vmax.f32 %v187, 0.0
    %v193 = vpack.c.bf16 %v191, %v191
    %v194 = vpack.c.bf16 %v192, %v192
    %v195 = vld [vmem:[%s3] sm:$0xff]
    %v196 = vld [vmem:[%s3 + $0x8] sm:$0xff]
    %v197 = vld [vmem:[%s3 + $0x10] sm:$0xff]
    %v198 = vld [vmem:[%s3 + $0x18] sm:$0xff]
    %v199 = vld [vmem:[%s3 + $0x20] sm:$0xff]
    %v200 = vld [vmem:[%s3 + $0x28] sm:$0xff]
    %v201 = vld [vmem:[%s3 + $0x30] sm:$0xff]
    %v202 = vld [vmem:[%s3 + $0x38] sm:$0xff]
    %v203 = vld [vmem:[%s3 + $0x40] sm:$0xff]
    %v204 = vld [vmem:[%s3 + $0x48] sm:$0xff]
    %v205 = vld [vmem:[%s3 + $0x50] sm:$0xff]
    %v206 = vld [vmem:[%s3 + $0x58] sm:$0xff]
    %v207 = vld [vmem:[%s3 + $0x60] sm:$0xff]
    %v208 = vld [vmem:[%s3 + $0x68] sm:$0xff]
    %v209 = vld [vmem:[%s3 + $0x70] sm:$0xff]
    %v210 = vld [vmem:[%s3 + $0x78] sm:$0xff]
    %v211 = vld [vmem:[%s3 + $0x80] sm:$0xff]
    %v212 = vld [vmem:[%s3 + $0x88] sm:$0xff]
    %v213 = vld [vmem:[%s3 + $0x90] sm:$0xff]
    %v214 = vld [vmem:[%s3 + $0x98] sm:$0xff]
    %v215 = vld [vmem:[%s3 + $0xa0] sm:$0xff]
    %v216 = vld [vmem:[%s3 + $0xa8] sm:$0xff]
    %v217 = vld [vmem:[%s3 + $0xb0] sm:$0xff]
    %v218 = vld [vmem:[%s3 + $0xb8] sm:$0xff]
    %v219 = vld [vmem:[%s3 + $0xc0] sm:$0xff]
    %v220 = vld [vmem:[%s3 + $0xc8] sm:$0xff]
    %v221 = vld [vmem:[%s3 + $0xd0] sm:$0xff]
    %v222 = vld [vmem:[%s3 + $0xd8] sm:$0xff]
    %v223 = vld [vmem:[%s3 + $0xe0] sm:$0xff]
    %v224 = vld [vmem:[%s3 + $0xe8] sm:$0xff]
    %v225 = vld [vmem:[%s3 + $0xf0] sm:$0xff]
    %v226 = vld [vmem:[%s3 + $0xf8] sm:$0xff]
    %v227 = vld [vmem:[%s4] sm:$0x3]
    %v229 = vlaneseq
    %v230 = vshrl.u32 %v229, 7
    %v231 = vsub.s32 0, %v230
    %v232 = vrot.slane %v227, %v231
    %v233 = vlaneseq
    %v234 = vshrl.u32 %v233, 7
    %v235 = vsub.s32 1, %v234
    %v236 = vrot.slane %v227, %v235
    %v271 = vunpack.c.l.b16 %v195
    %v272 = vunpack.c.h.b16 %v195
    %v273 = vunpack.c.l.b16 %v196
    %v274 = vunpack.c.h.b16 %v196
    %v275 = vunpack.c.l.b16 %v197
    %v276 = vunpack.c.h.b16 %v197
    %v277 = vunpack.c.l.b16 %v198
    %v278 = vunpack.c.h.b16 %v198
    %v279 = vunpack.c.l.b16 %v199
    %v280 = vunpack.c.h.b16 %v199
    %v281 = vunpack.c.l.b16 %v200
    %v282 = vunpack.c.h.b16 %v200
    %v283 = vunpack.c.l.b16 %v201
    %v284 = vunpack.c.h.b16 %v201
    %v285 = vunpack.c.l.b16 %v202
    %v286 = vunpack.c.h.b16 %v202
    %v287 = vunpack.c.l.b16 %v203
    %v288 = vunpack.c.h.b16 %v203
    %v289 = vunpack.c.l.b16 %v204
    %v290 = vunpack.c.h.b16 %v204
    %v291 = vunpack.c.l.b16 %v205
    %v292 = vunpack.c.h.b16 %v205
    %v293 = vunpack.c.l.b16 %v206
    %v294 = vunpack.c.h.b16 %v206
    %v295 = vunpack.c.l.b16 %v207
    %v296 = vunpack.c.h.b16 %v207
    %v297 = vunpack.c.l.b16 %v208
    %v298 = vunpack.c.h.b16 %v208
    %v299 = vunpack.c.l.b16 %v209
    %v300 = vunpack.c.h.b16 %v209
    %v301 = vunpack.c.l.b16 %v210
    %v302 = vunpack.c.h.b16 %v210
    %v303 = vunpack.c.l.b16 %v211
    %v304 = vunpack.c.h.b16 %v211
    %v305 = vunpack.c.l.b16 %v212
    %v306 = vunpack.c.h.b16 %v212
    %v307 = vunpack.c.l.b16 %v213
    %v308 = vunpack.c.h.b16 %v213
    %v309 = vunpack.c.l.b16 %v214
    %v310 = vunpack.c.h.b16 %v214
    %v311 = vunpack.c.l.b16 %v215
    %v312 = vunpack.c.h.b16 %v215
    %v313 = vunpack.c.l.b16 %v216
    %v314 = vunpack.c.h.b16 %v216
    %v315 = vunpack.c.l.b16 %v217
    %v316 = vunpack.c.h.b16 %v217
    %v317 = vunpack.c.l.b16 %v218
    %v318 = vunpack.c.h.b16 %v218
    %v319 = vunpack.c.l.b16 %v219
    %v320 = vunpack.c.h.b16 %v219
    %v321 = vunpack.c.l.b16 %v220
    %v322 = vunpack.c.h.b16 %v220
    %v323 = vunpack.c.l.b16 %v221
    %v324 = vunpack.c.h.b16 %v221
    %v325 = vunpack.c.l.b16 %v222
    %v326 = vunpack.c.h.b16 %v222
    %v327 = vunpack.c.l.b16 %v223
    %v328 = vunpack.c.h.b16 %v223
    %v329 = vunpack.c.l.b16 %v224
    %v330 = vunpack.c.h.b16 %v224
    %v331 = vunpack.c.l.b16 %v225
    %v332 = vunpack.c.h.b16 %v225
    %v333 = vunpack.c.l.b16 %v226
    %v334 = vunpack.c.h.b16 %v226
    %v335 = vpack.c.b16 %v273, %v271
    %v336 = vpack.c.b16 %v274, %v272
    %v337 = vpack.c.b16 %v277, %v275
    %v338 = vpack.c.b16 %v278, %v276
    %v339 = vpack.c.b16 %v281, %v279
    %v340 = vpack.c.b16 %v282, %v280
    %v341 = vpack.c.b16 %v285, %v283
    %v342 = vpack.c.b16 %v286, %v284
    %v343 = vpack.c.b16 %v289, %v287
    %v344 = vpack.c.b16 %v290, %v288
    %v345 = vpack.c.b16 %v293, %v291
    %v346 = vpack.c.b16 %v294, %v292
    %v347 = vpack.c.b16 %v297, %v295
    %v348 = vpack.c.b16 %v298, %v296
    %v349 = vpack.c.b16 %v301, %v299
    %v350 = vpack.c.b16 %v302, %v300
    %v351 = vpack.c.b16 %v305, %v303
    %v352 = vpack.c.b16 %v306, %v304
    %v353 = vpack.c.b16 %v309, %v307
    %v354 = vpack.c.b16 %v310, %v308
    %v355 = vpack.c.b16 %v313, %v311
    %v356 = vpack.c.b16 %v314, %v312
    %v357 = vpack.c.b16 %v317, %v315
    %v358 = vpack.c.b16 %v318, %v316
    %v359 = vpack.c.b16 %v321, %v319
    %v360 = vpack.c.b16 %v322, %v320
    %v361 = vpack.c.b16 %v325, %v323
    %v362 = vpack.c.b16 %v326, %v324
    %v363 = vpack.c.b16 %v329, %v327
    %v364 = vpack.c.b16 %v330, %v328
    %v365 = vpack.c.b16 %v333, %v331
    %v366 = vpack.c.b16 %v334, %v332
    %399 = vmatprep.subr.bf16.mxu0 %v336
    %400 = vmatpush1.bf16.msra.mxu0 %v335
    %401 = vmatprep.subr.bf16.mxu0 %v338
    %402 = vmatpush1.bf16.msra.mxu0 %v337
    %403 = vmatprep.subr.bf16.mxu0 %v340
    %404 = vmatpush1.bf16.msra.mxu0 %v339
    %405 = vmatprep.subr.bf16.mxu0 %v342
    %406 = vmatpush1.bf16.msra.mxu0 %v341
    %407 = vmatprep.subr.bf16.mxu0 %v344
    %408 = vmatpush1.bf16.msra.mxu0 %v343
    %409 = vmatprep.subr.bf16.mxu0 %v346
    %410 = vmatpush1.bf16.msra.mxu0 %v345
    %411 = vmatprep.subr.bf16.mxu0 %v348
    %412 = vmatpush1.bf16.msra.mxu0 %v347
    %413 = vmatprep.subr.bf16.mxu0 %v350
    %414 = vmatpush1.bf16.msra.mxu0 %v349
    %415 = vmatprep.subr.bf16.mxu0 %v352
    %416 = vmatpush1.bf16.msra.mxu0 %v351
    %417 = vmatprep.subr.bf16.mxu0 %v354
    %418 = vmatpush1.bf16.msra.mxu0 %v353
    %419 = vmatprep.subr.bf16.mxu0 %v356
    %420 = vmatpush1.bf16.msra.mxu0 %v355
    %421 = vmatprep.subr.bf16.mxu0 %v358
    %422 = vmatpush1.bf16.msra.mxu0 %v357
    %423 = vmatprep.subr.bf16.mxu0 %v360
    %424 = vmatpush1.bf16.msra.mxu0 %v359
    %425 = vmatprep.subr.bf16.mxu0 %v362
    %426 = vmatpush1.bf16.msra.mxu0 %v361
    %427 = vmatprep.subr.bf16.mxu0 %v364
    %428 = vmatpush1.bf16.msra.mxu0 %v363
    %429 = vmatprep.subr.bf16.mxu0 %v366
    %430 = vmatpush1.bf16.msra.mxu0 %v365
    %431 = vmatprep.mubr.bf16.mxu0 %v194
    %432 = vmatmul.mubr.bf16.gmra.mrb[0].mxu0 %v193
    %v433 = vpop.f32.mrb[0].mxu0
    %v434 = vadd.f32 %v232, %v433
    %v435 = vpop.f32.mrb[0].mxu0
    %v436 = vadd.f32 %v236, %v435
    %v437 = vpop.f32.mrb[0].mxu0
    %v438 = vpop.f32.mrb[0].mxu0
    %439 = vdwg.mxu0
    %v440 = vmax.f32 %v434, 0.0
    %v441 = vmax.f32 %v436, 0.0
    %v442 = vpack.c.bf16 %v440, %v440
    %v443 = vpack.c.bf16 %v441, %v441
    %v444 = vld [vmem:[%s5] sm:$0xf]
    %v445 = vld [vmem:[%s5 + $0x4] sm:$0xf]
    %v446 = vld [vmem:[%s5 + $0x8] sm:$0xf]
    %v447 = vld [vmem:[%s5 + $0xc] sm:$0xf]
    %v448 = vld [vmem:[%s5 + $0x10] sm:$0xf]
    %v449 = vld [vmem:[%s5 + $0x14] sm:$0xf]
    %v450 = vld [vmem:[%s5 + $0x18] sm:$0xf]
    %v451 = vld [vmem:[%s5 + $0x1c] sm:$0xf]
    %v452 = vld [vmem:[%s5 + $0x20] sm:$0xf]
    %v453 = vld [vmem:[%s5 + $0x24] sm:$0xf]
    %v454 = vld [vmem:[%s5 + $0x28] sm:$0xf]
    %v455 = vld [vmem:[%s5 + $0x2c] sm:$0xf]
    %v456 = vld [vmem:[%s5 + $0x30] sm:$0xf]
    %v457 = vld [vmem:[%s5 + $0x34] sm:$0xf]
    %v458 = vld [vmem:[%s5 + $0x38] sm:$0xf]
    %v459 = vld [vmem:[%s5 + $0x3c] sm:$0xf]
    %v460 = vld [vmem:[%s5 + $0x40] sm:$0xf]
    %v461 = vld [vmem:[%s5 + $0x44] sm:$0xf]
    %v462 = vld [vmem:[%s5 + $0x48] sm:$0xf]
    %v463 = vld [vmem:[%s5 + $0x4c] sm:$0xf]
    %v464 = vld [vmem:[%s5 + $0x50] sm:$0xf]
    %v465 = vld [vmem:[%s5 + $0x54] sm:$0xf]
    %v466 = vld [vmem:[%s5 + $0x58] sm:$0xf]
    %v467 = vld [vmem:[%s5 + $0x5c] sm:$0xf]
    %v468 = vld [vmem:[%s5 + $0x60] sm:$0xf]
    %v469 = vld [vmem:[%s5 + $0x64] sm:$0xf]
    %v470 = vld [vmem:[%s5 + $0x68] sm:$0xf]
    %v471 = vld [vmem:[%s5 + $0x6c] sm:$0xf]
    %v472 = vld [vmem:[%s5 + $0x70] sm:$0xf]
    %v473 = vld [vmem:[%s5 + $0x74] sm:$0xf]
    %v474 = vld [vmem:[%s5 + $0x78] sm:$0xf]
    %v475 = vld [vmem:[%s5 + $0x7c] sm:$0xf]
    %v476 = vld [vmem:[%s6] sm:$0x1]
    %v478 = vlaneseq
    %v479 = vshrl.u32 %v478, 7
    %v480 = vsub.s32 0, %v479
    %v481 = vrot.slane %v476, %v480
    %v515 = vunpack.c.l.b16 %v444
    %v516 = vunpack.c.l.b16 %v445
    %v517 = vunpack.c.l.b16 %v446
    %v518 = vunpack.c.l.b16 %v447
    %v519 = vunpack.c.l.b16 %v448
    %v520 = vunpack.c.l.b16 %v449
    %v521 = vunpack.c.l.b16 %v450
    %v522 = vunpack.c.l.b16 %v451
    %v523 = vunpack.c.l.b16 %v452
    %v524 = vunpack.c.l.b16 %v453
    %v525 = vunpack.c.l.b16 %v454
    %v526 = vunpack.c.l.b16 %v455
    %v527 = vunpack.c.l.b16 %v456
    %v528 = vunpack.c.l.b16 %v457
    %v529 = vunpack.c.l.b16 %v458
    %v530 = vunpack.c.l.b16 %v459
    %v531 = vunpack.c.l.b16 %v460
    %v532 = vunpack.c.l.b16 %v461
    %v533 = vunpack.c.l.b16 %v462
    %v534 = vunpack.c.l.b16 %v463
    %v535 = vunpack.c.l.b16 %v464
    %v536 = vunpack.c.l.b16 %v465
    %v537 = vunpack.c.l.b16 %v466
    %v538 = vunpack.c.l.b16 %v467
    %v539 = vunpack.c.l.b16 %v468
    %v540 = vunpack.c.l.b16 %v469
    %v541 = vunpack.c.l.b16 %v470
    %v542 = vunpack.c.l.b16 %v471
    %v543 = vunpack.c.l.b16 %v472
    %v544 = vunpack.c.l.b16 %v473
    %v545 = vunpack.c.l.b16 %v474
    %v546 = vunpack.c.l.b16 %v475
    %v547 = vpack.c.b16 %v516, %v515
    %v548 = vpack.c.b16 %v518, %v517
    %v549 = vpack.c.b16 %v520, %v519
    %v550 = vpack.c.b16 %v522, %v521
    %v551 = vpack.c.b16 %v524, %v523
    %v552 = vpack.c.b16 %v526, %v525
    %v553 = vpack.c.b16 %v528, %v527
    %v554 = vpack.c.b16 %v530, %v529
    %v555 = vpack.c.b16 %v532, %v531
    %v556 = vpack.c.b16 %v534, %v533
    %v557 = vpack.c.b16 %v536, %v535
    %v558 = vpack.c.b16 %v538, %v537
    %v559 = vpack.c.b16 %v540, %v539
    %v560 = vpack.c.b16 %v542, %v541
    %v561 = vpack.c.b16 %v544, %v543
    %v562 = vpack.c.b16 %v546, %v545
    %579 = vmatprep.subr.bf16.mxu0 0
    %580 = vmatpush1.bf16.msra.mxu0 %v547
    %581 = vmatprep.subr.bf16.mxu0 0
    %582 = vmatpush1.bf16.msra.mxu0 %v548
    %583 = vmatprep.subr.bf16.mxu0 0
    %584 = vmatpush1.bf16.msra.mxu0 %v549
    %585 = vmatprep.subr.bf16.mxu0 0
    %586 = vmatpush1.bf16.msra.mxu0 %v550
    %587 = vmatprep.subr.bf16.mxu0 0
    %588 = vmatpush1.bf16.msra.mxu0 %v551
    %589 = vmatprep.subr.bf16.mxu0 0
    %590 = vmatpush1.bf16.msra.mxu0 %v552
    %591 = vmatprep.subr.bf16.mxu0 0
    %592 = vmatpush1.bf16.msra.mxu0 %v553
    %593 = vmatprep.subr.bf16.mxu0 0
    %594 = vmatpush1.bf16.msra.mxu0 %v554
    %595 = vmatprep.subr.bf16.mxu0 0
    %596 = vmatpush1.bf16.msra.mxu0 %v555
    %597 = vmatprep.subr.bf16.mxu0 0
    %598 = vmatpush1.bf16.msra.mxu0 %v556
    %599 = vmatprep.subr.bf16.mxu0 0
    %600 = vmatpush1.bf16.msra.mxu0 %v557
    %601 = vmatprep.subr.bf16.mxu0 0
    %602 = vmatpush1.bf16.msra.mxu0 %v558
    %603 = vmatprep.subr.bf16.mxu0 0
    %604 = vmatpush1.bf16.msra.mxu0 %v559
    %605 = vmatprep.subr.bf16.mxu0 0
    %606 = vmatpush1.bf16.msra.mxu0 %v560
    %607 = vmatprep.subr.bf16.mxu0 0
    %608 = vmatpush1.bf16.msra.mxu0 %v561
    %609 = vmatprep.subr.bf16.mxu0 0
    %610 = vmatpush1.bf16.msra.mxu0 %v562
    %611 = vmatprep.mubr.bf16.mxu0 %v443
    %612 = vmatmul.mubr.bf16.gmra.mrb[0].mxu0 %v442
    %v613 = vpop.f32.mrb[0].mxu0
    %v614 = vadd.f32 %v481, %v613
    %v615 = vpop.f32.mrb[0].mxu0
    %v616 = vpop.f32.mrb[0].mxu0
    %v617 = vpop.f32.mrb[0].mxu0
    %618 = vdwg.mxu0
    %v619 = vxor.u32 %v614, 2147483648
    %v620 = vmul.f32 %v619, 1.442695
    %v621 = vpow.pop %v620
    %v622 = vadd.f32 %v621, 1.0
    %v623 = vrcp.pop %v622
    %v624 = vmul.f32 1.0, %v623
    %v625 = vmul.f32 %v624, 2.0
    %vm626 = vcmask 523264
    %627 = vst.msk [vmem:[%s7] sm:$0xff] %vm626, %v625
    // Predicated region
    $region34: #{designer_net_forward.1} parent=1 // pred_check
      _
    $region35: #{designer_net_forward.1} parent=1 // pred_check_branch
      %629 = sbr.rel (0) target = $region37
    $region36: #{designer_net_forward.1} parent=1 // pred_region
      _
    $region37: #{designer_net_forward.1} parent=1 // pred_fallthru
      _
    // Predicated region
    $region38: #{designer_net_forward.1} parent=1 // pred_check
      _
    $region39: #{designer_net_forward.1} parent=1 // pred_check_branch
      %631 = sbr.rel (0) target = $region41
    $region40: #{designer_net_forward.1} parent=1 // pred_region
      _
    $region41: #{designer_net_forward.1} parent=1 // pred_fallthru
      _
    %632 = vsyncpa [#allocation3], 1

</llo_original>
